<compile_context>
chip_gen: v7x
topology: tpu7x:2x2x1
jax: 0.10.0
libtpu: 0.0.40
codegen_flags: <defaults>
</compile_context>

<pallas_src>
import functools

import jax
import jax.numpy as jnp
from jax.experimental import pallas as pl
from jax.experimental.pallas import tpu as pltpu


TN = 1024         # points per grid step (8 full vregs of lanes)
NUM_CHUNKS = 3    # bf16 chunks of the f32 depth map (3 => exact f32 gather)


def _feature_point_loss_kernel(depth_ref, pts_ref, refd_ref, out_ref,
                               *, H, W, N, delta):
    tile = pl.program_id(0)

    pts = pts_ref[...].astype(jnp.float32)        # (2, TN), points on lanes
    refd = refd_ref[...].astype(jnp.float32)      # (1, TN)
    x = pts[0:1, :]                               # (1, TN) width coord in [-1, 1]
    y = pts[1:2, :]                               # (1, TN) height coord in [-1, 1]

    # grid_sample unnormalization, align_corners=False: src = ((c + 1)*size - 1)/2
    ix = ((x + 1.0) * W - 1.0) * 0.5
    iy = ((y + 1.0) * H - 1.0) * 0.5

    # mode='nearest': round-half-to-even (matches torch nearbyint).
    ixn = jnp.round(ix)
    iyn = jnp.round(iy)

    # padding_mode='zeros': out-of-bounds nearest samples contribute 0.
    valid = ((ixn >= 0.0) & (ixn <= float(W - 1)) &
             (iyn >= 0.0) & (iyn <= float(H - 1)))
    ixi = jnp.clip(ixn, 0.0, float(W - 1)).astype(jnp.int32)   # (1, TN)
    iyi = jnp.clip(iyn, 0.0, float(H - 1)).astype(jnp.int32)   # (1, TN)

    # ---- Stage 1 (MXU): column gather via bf16 one-hot matmul. ----
    # onehot_x[w, p] = (w == ixi[p]); colgather[h, p] = depth[h, ixi[p]].
    col_iota = jax.lax.broadcasted_iota(jnp.int32, (W, TN), 0)
    onehot_x = jnp.where(col_iota == ixi, 1.0, 0.0).astype(jnp.bfloat16)  # (W, TN)
    colgather = jnp.dot(depth_ref[0], onehot_x,
                        preferred_element_type=jnp.float32)               # (H, TN)
    for c in range(1, NUM_CHUNKS):
        colgather = colgather + jnp.dot(depth_ref[c], onehot_x,
                                        preferred_element_type=jnp.float32)

    # ---- Stage 2 (VPU + sublane reduce): row select. ----
    row_iota = jax.lax.broadcasted_iota(jnp.int32, (H, TN), 0)
    sampled = jnp.sum(jnp.where(row_iota == iyi, colgather, 0.0),
                      axis=0, keepdims=True)                              # (1, TN)
    sampled = jnp.where(valid, sampled, 0.0)

    # HuberLoss(delta, reduction='none') between reference depth and sample.
    diff = refd - sampled
    adiff = jnp.abs(diff)
    huber = jnp.where(adiff < delta,
                      0.5 * diff * diff,
                      delta * (adiff - 0.5 * delta))

    # Divide by reference depth; zero out padding lanes past the true N.
    lane = jax.lax.broadcasted_iota(jnp.int32, (1, TN), 1)
    in_range = (tile * TN + lane) < N
    out_ref[...] = jnp.where(in_range, huber / refd, 0.0)                 # (1, TN)


def feature_point_loss(abs_depth, points2D_11, sparse_ref_depths, huber_delta=0.5):
    """Pallas forward of FeaturePointLoss. Returns a scalar f32 loss."""
    H, W = abs_depth.shape
    N = points2D_11.shape[0]
    num_tiles = int(pl.cdiv(N, TN))
    Np = num_tiles * TN

    # Split the f32 depth map ONCE into non-overlapping bf16 chunks.  Each chunk
    # is gathered exactly by the bf16 MXU one-hot matmul (products with 0/1 are
    # exact); summing the f32 partials reconstructs the f32 sample exactly.
    resid = abs_depth.astype(jnp.float32)
    chunks = []
    for _ in range(NUM_CHUNKS):
        c = resid.astype(jnp.bfloat16)
        chunks.append(c)
        resid = resid - c.astype(jnp.float32)
    depth_chunks = jnp.stack(chunks, axis=0)                    # (3, H, W) bf16

    # Lane-dense per-point layout, padded to a multiple of TN.
    pts_t = jnp.pad(points2D_11.T.astype(jnp.float32),
                    ((0, 0), (0, Np - N)))                      # (2, Np)
    refd_t = jnp.pad(sparse_ref_depths.reshape(1, N).astype(jnp.float32),
                     ((0, 0), (0, Np - N)), constant_values=1.0)  # (1, Np)

    kernel = functools.partial(_feature_point_loss_kernel,
                               H=H, W=W, N=N, delta=float(huber_delta))

    per_point = pl.pallas_call(
        kernel,
        grid=(num_tiles,),
        in_specs=[
            # Resident 2-D depth chunks (constant block index -> fetched once per core).
            pl.BlockSpec((NUM_CHUNKS, H, W), lambda i: (0, 0, 0)),
            pl.BlockSpec((2, TN), lambda i: (0, i)),            # point tile (streamed)
            pl.BlockSpec((1, TN), lambda i: (0, i)),            # ref-depth tile
        ],
        out_specs=pl.BlockSpec((1, TN), lambda i: (0, i)),      # lane-dense per-point loss
        out_shape=jax.ShapeDtypeStruct((1, Np), jnp.float32),
        compiler_params=pltpu.CompilerParams(
            dimension_semantics=("parallel",),
            vmem_limit_bytes=32 * 1024 * 1024),
    )(depth_chunks, pts_t, refd_t)

    # Mean over the true N points (padded lanes are exactly zero); reduction in XLA.
    return jnp.sum(per_point) / N


def _reference_loss(abs_depth, points2D_11, sparse_ref_depths, delta=0.5):
    """Pure-JAX reference (mirrors torch grid_sample nearest + HuberLoss)."""
    H, W = abs_depth.shape
    ix = ((points2D_11[:, 0] + 1.0) * W - 1.0) * 0.5
    iy = ((points2D_11[:, 1] + 1.0) * H - 1.0) * 0.5
    ixn = jnp.round(ix).astype(jnp.int32)
    iyn = jnp.round(iy).astype(jnp.int32)
    valid = (ixn >= 0) & (ixn < W) & (iyn >= 0) & (iyn < H)
    sampled = abs_depth[jnp.clip(iyn, 0, H - 1), jnp.clip(ixn, 0, W - 1)]
    sampled = jnp.where(valid, sampled, 0.0)[:, None]
    diff = sparse_ref_depths - sampled
    adiff = jnp.abs(diff)
    huber = jnp.where(adiff < delta, 0.5 * diff * diff,
                      delta * (adiff - 0.5 * delta))
    return jnp.mean(huber / sparse_ref_depths)


if __name__ == "__main__":
    key = jax.random.PRNGKey(0)
    k1, k2, k3, k4 = jax.random.split(key, 4)

    N, H, W = 64, 16, 16
    huber_delta = 0.5

    # v_points3D: (1, N, 3), z in [-5, -1] so sparse_ref_depths = -z is positive.
    xy3d = jax.random.uniform(k1, (1, N, 2), minval=-1.0, maxval=1.0)
    z3d = jax.random.uniform(k2, (1, N, 1), minval=-5.0, maxval=-1.0)
    v_points3D = jnp.concatenate([xy3d, z3d], axis=-1)          # (1, N, 3)
    sparse_ref_depths = -v_points3D[0, :, 2:3]                  # (N, 1)

    # points2D_11: (N, 2) normalized [-1, 1] grid coordinates.
    points2D_11 = jax.random.uniform(k3, (N, 2), minval=-1.0, maxval=1.0)

    # abs_depth: (H, W) positive depth map.
    abs_depth = jax.random.uniform(k4, (H, W), minval=1.0, maxval=5.0)

    loss = feature_point_loss(abs_depth, points2D_11, sparse_ref_depths,
                              huber_delta=huber_delta)
    loss = jax.block_until_ready(loss)

    ref = _reference_loss(abs_depth, points2D_11, sparse_ref_depths,
                          delta=huber_delta)
    ref = jax.block_until_ready(ref)

    assert jnp.allclose(loss, ref, rtol=2e-5, atol=2e-6), (loss, ref)
    print("KERNEL_OK")
</pallas_src>

<mosaic_0001>
module attributes {stable_mosaic.version = 11 : i64} {
  func.func @_feature_point_loss_kernel(%arg0: i32, %arg1: memref<3x16x16xbf16, #tpu.memory_space<vmem>>, %arg2: memref<2x1024xf32, #tpu.memory_space<vmem>>, %arg3: memref<1x1024xf32, #tpu.memory_space<vmem>>, %arg4: memref<1x1024xf32, #tpu.memory_space<vmem>>) attributes {dimension_semantics = [#tpu.dimension_semantics<parallel>], iteration_bounds = array<i64: 1>, scalar_prefetch = 0 : i64, scratch_operands = 0 : i64, tpu.core_type = #tpu.core_type<tc>, window_params = [{pipeline_mode = #tpu.pipeline_mode<synchronous>, transform_indices = @transform_0, window_bounds = array<i64: 3, 16, 16>}, {transform_indices = @transform_1, window_bounds = array<i64: 2, 1024>}, {transform_indices = @transform_2, window_bounds = array<i64: 1, 1024>}, {transform_indices = @transform_3, window_bounds = array<i64: 1, 1024>}]} {
    %c0 = arith.constant 0 : index
    %c0_0 = arith.constant 0 : index
    %0 = vector.load %arg2[%c0, %c0_0] : memref<2x1024xf32, #tpu.memory_space<vmem>>, vector<2x1024xf32>
    %c0_1 = arith.constant 0 : index
    %c0_2 = arith.constant 0 : index
    %1 = vector.load %arg3[%c0_1, %c0_2] : memref<1x1024xf32, #tpu.memory_space<vmem>>, vector<1x1024xf32>
    %2 = vector.extract_strided_slice %0 {offsets = [0, 0], sizes = [1, 1024], strides = [1, 1]} : vector<2x1024xf32> to vector<1x1024xf32>
    %3 = vector.extract_strided_slice %0 {offsets = [1, 0], sizes = [1, 1024], strides = [1, 1]} : vector<2x1024xf32> to vector<1x1024xf32>
    %cst = arith.constant 1.000000e+00 : f32
    %4 = vector.broadcast %cst : f32 to vector<1x1024xf32>
    %5 = arith.addf %2, %4 : vector<1x1024xf32>
    %cst_3 = arith.constant 1.600000e+01 : f32
    %6 = vector.broadcast %cst_3 : f32 to vector<1x1024xf32>
    %7 = arith.mulf %5, %6 : vector<1x1024xf32>
    %cst_4 = arith.constant 1.000000e+00 : f32
    %8 = vector.broadcast %cst_4 : f32 to vector<1x1024xf32>
    %9 = arith.subf %7, %8 : vector<1x1024xf32>
    %cst_5 = arith.constant 5.000000e-01 : f32
    %10 = vector.broadcast %cst_5 : f32 to vector<1x1024xf32>
    %11 = arith.mulf %9, %10 : vector<1x1024xf32>
    %cst_6 = arith.constant 1.000000e+00 : f32
    %12 = vector.broadcast %cst_6 : f32 to vector<1x1024xf32>
    %13 = arith.addf %3, %12 : vector<1x1024xf32>
    %cst_7 = arith.constant 1.600000e+01 : f32
    %14 = vector.broadcast %cst_7 : f32 to vector<1x1024xf32>
    %15 = arith.mulf %13, %14 : vector<1x1024xf32>
    %cst_8 = arith.constant 1.000000e+00 : f32
    %16 = vector.broadcast %cst_8 : f32 to vector<1x1024xf32>
    %17 = arith.subf %15, %16 : vector<1x1024xf32>
    %cst_9 = arith.constant 5.000000e-01 : f32
    %18 = vector.broadcast %cst_9 : f32 to vector<1x1024xf32>
    %19 = arith.mulf %17, %18 : vector<1x1024xf32>
    %20 = math.roundeven %11 : vector<1x1024xf32>
    %21 = math.roundeven %19 : vector<1x1024xf32>
    %cst_10 = arith.constant 0.000000e+00 : f32
    %22 = vector.broadcast %cst_10 : f32 to vector<1x1024xf32>
    %23 = arith.cmpf oge, %20, %22 : vector<1x1024xf32>
    %cst_11 = arith.constant 1.500000e+01 : f32
    %24 = vector.broadcast %cst_11 : f32 to vector<1x1024xf32>
    %25 = arith.cmpf ole, %20, %24 : vector<1x1024xf32>
    %26 = arith.andi %23, %25 : vector<1x1024xi1>
    %cst_12 = arith.constant 0.000000e+00 : f32
    %27 = vector.broadcast %cst_12 : f32 to vector<1x1024xf32>
    %28 = arith.cmpf oge, %21, %27 : vector<1x1024xf32>
    %29 = arith.andi %26, %28 : vector<1x1024xi1>
    %cst_13 = arith.constant 1.500000e+01 : f32
    %30 = vector.broadcast %cst_13 : f32 to vector<1x1024xf32>
    %31 = arith.cmpf ole, %21, %30 : vector<1x1024xf32>
    %32 = arith.andi %29, %31 : vector<1x1024xi1>
    %cst_14 = arith.constant 0.000000e+00 : f32
    %cst_15 = arith.constant 1.500000e+01 : f32
    %33 = vector.broadcast %cst_14 : f32 to vector<1x1024xf32>
    %34 = arith.maximumf %33, %20 : vector<1x1024xf32>
    %35 = vector.broadcast %cst_15 : f32 to vector<1x1024xf32>
    %36 = arith.minimumf %35, %34 : vector<1x1024xf32>
    %37 = arith.fptosi %36 : vector<1x1024xf32> to vector<1x1024xi32>
    %cst_16 = arith.constant 0.000000e+00 : f32
    %cst_17 = arith.constant 1.500000e+01 : f32
    %38 = vector.broadcast %cst_16 : f32 to vector<1x1024xf32>
    %39 = arith.maximumf %38, %21 : vector<1x1024xf32>
    %40 = vector.broadcast %cst_17 : f32 to vector<1x1024xf32>
    %41 = arith.minimumf %40, %39 : vector<1x1024xf32>
    %42 = arith.fptosi %41 : vector<1x1024xf32> to vector<1x1024xi32>
    %43 = tpu.iota {dimensions = array<i32: 0>} : vector<16x1024xi32>
    %44 = vector.broadcast %37 : vector<1x1024xi32> to vector<16x1024xi32>
    %45 = arith.cmpi eq, %43, %44 : vector<16x1024xi32>
    %cst_18 = arith.constant 1.000000e+00 : f32
    %cst_19 = arith.constant 0.000000e+00 : f32
    %46 = vector.broadcast %cst_18 : f32 to vector<16x1024xf32>
    %47 = vector.broadcast %cst_19 : f32 to vector<16x1024xf32>
    %48 = arith.select %45, %46, %47 : vector<16x1024xi1>, vector<16x1024xf32>
    %49 = arith.truncf %48 : vector<16x1024xf32> to vector<16x1024xbf16>
    %c0_20 = arith.constant 0 : index
    %c0_21 = arith.constant 0 : index
    %c0_22 = arith.constant 0 : index
    %50 = vector.load %arg1[%c0_20, %c0_21, %c0_22] : memref<3x16x16xbf16, #tpu.memory_space<vmem>>, vector<1x16x16xbf16>
    %51 = vector.shape_cast %50 : vector<1x16x16xbf16> to vector<16x16xbf16>
    %cst_23 = arith.constant dense<0.000000e+00> : vector<16x1024xf32>
    %52 = tpu.matmul %51, %49, %cst_23 {dimension_numbers = #tpu.dot_dimension_numbers<[1], [0], [0], [1], [0, 0, 1, 1], [], []>} : vector<16x16xbf16>, vector<16x1024xbf16>, vector<16x1024xf32> -> vector<16x1024xf32>
    %c1 = arith.constant 1 : index
    %c0_24 = arith.constant 0 : index
    %c0_25 = arith.constant 0 : index
    %53 = vector.load %arg1[%c1, %c0_24, %c0_25] : memref<3x16x16xbf16, #tpu.memory_space<vmem>>, vector<1x16x16xbf16>
    %54 = vector.shape_cast %53 : vector<1x16x16xbf16> to vector<16x16xbf16>
    %cst_26 = arith.constant dense<0.000000e+00> : vector<16x1024xf32>
    %55 = tpu.matmul %54, %49, %cst_26 {dimension_numbers = #tpu.dot_dimension_numbers<[1], [0], [0], [1], [0, 0, 1, 1], [], []>} : vector<16x16xbf16>, vector<16x1024xbf16>, vector<16x1024xf32> -> vector<16x1024xf32>
    %56 = arith.addf %52, %55 : vector<16x1024xf32>
    %c2 = arith.constant 2 : index
    %c0_27 = arith.constant 0 : index
    %c0_28 = arith.constant 0 : index
    %57 = vector.load %arg1[%c2, %c0_27, %c0_28] : memref<3x16x16xbf16, #tpu.memory_space<vmem>>, vector<1x16x16xbf16>
    %58 = vector.shape_cast %57 : vector<1x16x16xbf16> to vector<16x16xbf16>
    %cst_29 = arith.constant dense<0.000000e+00> : vector<16x1024xf32>
    %59 = tpu.matmul %58, %49, %cst_29 {dimension_numbers = #tpu.dot_dimension_numbers<[1], [0], [0], [1], [0, 0, 1, 1], [], []>} : vector<16x16xbf16>, vector<16x1024xbf16>, vector<16x1024xf32> -> vector<16x1024xf32>
    %60 = arith.addf %56, %59 : vector<16x1024xf32>
    %61 = tpu.iota {dimensions = array<i32: 0>} : vector<16x1024xi32>
    %62 = vector.broadcast %42 : vector<1x1024xi32> to vector<16x1024xi32>
    %63 = arith.cmpi eq, %61, %62 : vector<16x1024xi32>
    %cst_30 = arith.constant 0.000000e+00 : f32
    %64 = vector.broadcast %cst_30 : f32 to vector<16x1024xf32>
    %65 = arith.select %63, %60, %64 : vector<16x1024xi1>, vector<16x1024xf32>
    %cst_31 = arith.constant dense<0.000000e+00> : vector<1024xf32>
    %66 = vector.multi_reduction <add>, %65, %cst_31 [0] : vector<16x1024xf32> to vector<1024xf32>
    %67 = vector.shape_cast %66 : vector<1024xf32> to vector<1x1024xf32>
    %cst_32 = arith.constant 0.000000e+00 : f32
    %68 = vector.broadcast %cst_32 : f32 to vector<1x1024xf32>
    %69 = arith.select %32, %67, %68 : vector<1x1024xi1>, vector<1x1024xf32>
    %70 = arith.subf %1, %69 : vector<1x1024xf32>
    %71 = math.absf %70 : vector<1x1024xf32>
    %cst_33 = arith.constant 5.000000e-01 : f32
    %72 = vector.broadcast %cst_33 : f32 to vector<1x1024xf32>
    %73 = arith.cmpf olt, %71, %72 : vector<1x1024xf32>
    %cst_34 = arith.constant 5.000000e-01 : f32
    %74 = vector.broadcast %cst_34 : f32 to vector<1x1024xf32>
    %75 = arith.mulf %74, %70 : vector<1x1024xf32>
    %76 = arith.mulf %75, %70 : vector<1x1024xf32>
    %cst_35 = arith.constant 2.500000e-01 : f32
    %77 = vector.broadcast %cst_35 : f32 to vector<1x1024xf32>
    %78 = arith.subf %71, %77 : vector<1x1024xf32>
    %cst_36 = arith.constant 5.000000e-01 : f32
    %79 = vector.broadcast %cst_36 : f32 to vector<1x1024xf32>
    %80 = arith.mulf %79, %78 : vector<1x1024xf32>
    %81 = arith.select %73, %76, %80 : vector<1x1024xi1>, vector<1x1024xf32>
    %82 = tpu.iota {dimensions = array<i32: 1>} : vector<1x1024xi32>
    %c1024_i32 = arith.constant 1024 : i32
    %83 = arith.muli %arg0, %c1024_i32 : i32
    %84 = vector.broadcast %83 : i32 to vector<1x1024xi32>
    %85 = arith.addi %84, %82 : vector<1x1024xi32>
    %c64_i32 = arith.constant 64 : i32
    %86 = vector.broadcast %c64_i32 : i32 to vector<1x1024xi32>
    %87 = arith.cmpi slt, %85, %86 : vector<1x1024xi32>
    %88 = arith.divf %81, %1 : vector<1x1024xf32>
    %cst_37 = arith.constant 0.000000e+00 : f32
    %89 = vector.broadcast %cst_37 : f32 to vector<1x1024xf32>
    %90 = arith.select %87, %88, %89 : vector<1x1024xi1>, vector<1x1024xf32>
    %c0_38 = arith.constant 0 : index
    %c0_39 = arith.constant 0 : index
    %91 = vector.load %arg4[%c0_38, %c0_39] : memref<1x1024xf32, #tpu.memory_space<vmem>>, vector<1x1024xf32>
    tpu.vector_store %arg4[%c0_38, %c0_39], %90 {strides = array<i32>} : memref<1x1024xf32, #tpu.memory_space<vmem>>, vector<1x1024xf32>,
    return
  }
  func.func @transform_0(%arg0: i32) -> (i32, i32, i32) {
    %c0_i32 = arith.constant 0 : i32
    %c0_i32_0 = arith.constant 0 : i32
    %c0_i32_1 = arith.constant 0 : i32
    %c0_i32_2 = arith.constant 0 : i32
    return %c0_i32, %c0_i32_0, %c0_i32_1 : i32, i32, i32
  }
  func.func @transform_1(%arg0: i32) -> (i32, i32) {
    %c0_i32 = arith.constant 0 : i32
    %c0_i32_0 = arith.constant 0 : i32
    return %c0_i32, %arg0 : i32, i32
  }
  func.func @transform_2(%arg0: i32) -> (i32, i32) {
    %c0_i32 = arith.constant 0 : i32
    %c0_i32_0 = arith.constant 0 : i32
    return %c0_i32, %arg0 : i32, i32
  }
  func.func @transform_3(%arg0: i32) -> (i32, i32) {
    %c0_i32 = arith.constant 0 : i32
    %c0_i32_0 = arith.constant 0 : i32
    return %c0_i32, %arg0 : i32, i32
  }
}

</mosaic_0001>

<llo_original>
// kernel: tpu_custom_call.1
$region0: #{tpu_custom_call.1}
  #allocation0 [shape = 'u32[]', space=smem, size = 0x4, offset = 0x4, fixed_abs, tag = 'smem constant byte address 0x4 - core index']
  #allocation1 [shape = 'u32[144,128]{1,0:T(1,128)}', space=vmem, size = 0x12000, scoped, tag = 'internal scratch']
  %s0 = inlined_call_operand.hbm [shape: bf16[3,16,16], index: 0, kind: input, shape index: {}]
  %s1 = inlined_call_operand.hbm [shape: f32[2,1024], index: 1, kind: input, shape index: {}]
  %s2 = inlined_call_operand.hbm [shape: f32[1,1024], index: 2, kind: input, shape index: {}]
  %s3 = inlined_call_operand.hbm [shape: f32[1,1024], index: 3, kind: output, shape index: {}]
  %s4 = sld [smem:[#allocation0]]
  $region34: #{tpu_custom_call.1} parent=0
    _
  %s6 = ssub.s32 1, %s4
  %s7 = scalar_select 0, %s6, %s4
  $region1: #{tpu_custom_call.1} parent=0
    #allocation2 [shape = 'u8[12288]{0}', space=vmem, size = 0x3000, scoped, tag = 'input window, operand 0, single buffered']
    #allocation3 [shape = 's32[1]{0}', space=sflag, size = 0x4, scoped, tag = 'scoped memory for tpu_custom_call.1']
    #allocation4 [shape = 's32[1]{0}', space=sflag, size = 0x4, scoped, tag = 'scoped memory for tpu_custom_call.1']
    #allocation5 [shape = 'u8[8192]{0}', space=vmem, size = 0x2000, scoped, tag = 'input window, operand 1, single buffered']
    #allocation6 [shape = 's32[1]{0}', space=sflag, size = 0x4, scoped, tag = 'scoped memory for tpu_custom_call.1']
    #allocation7 [shape = 'u8[4096]{0}', space=vmem, size = 0x1000, scoped, tag = 'input window, operand 2, single buffered']
    #allocation8 [shape = 'u8[4096]{0}', space=vmem, size = 0x1000, scoped, tag = 'output window, operand 0, single buffered']
    %8 = vsyncpa [#allocation3], 0
    %9 = vsyncpa [#allocation6], 0
    %10 = vsyncpa [#allocation4], 0
    // Predicated region
    $region2: #{tpu_custom_call.1} parent=1 // pred_check
      _
    $region3: #{tpu_custom_call.1} parent=1 // pred_check_branch
      %12 = sbr.rel (0) target = $region5
    $region4: #{tpu_custom_call.1} parent=1 // pred_region
      %s14 = ssub.s32 384, 384
      %15 = vsyncadd [#allocation3], %s14
      %s16 = sshll.u32 [#allocation2], 4
      %s17 = int_to_ptr.vmem [resolvable:$true] %s16
      %22 = dma.hbm_to_vmem [thread:$0]  %s0, 384, %s17, [#allocation3], 64, 64, 4
    $region5: #{tpu_custom_call.1} parent=1 // pred_fallthru
      _
    // Predicated region
    $region6: #{tpu_custom_call.1} parent=1 // pred_check
      _
    $region7: #{tpu_custom_call.1} parent=1 // pred_check_branch
      %24 = sbr.rel (0) target = $region9
    $region8: #{tpu_custom_call.1} parent=1 // pred_region
      %s26 = ssub.s32 256, 256
      %27 = vsyncadd [#allocation6], %s26
      %s29 = sshll.u32 [#allocation5], 4
      %s30 = int_to_ptr.vmem [resolvable:$true] %s29
      %32 = dma.hbm_to_vmem [thread:$0]  %s1, 256, %s30, [#allocation6]
    $region9: #{tpu_custom_call.1} parent=1 // pred_fallthru
      _
    // Predicated region
    $region10: #{tpu_custom_call.1} parent=1 // pred_check
      _
    $region11: #{tpu_custom_call.1} parent=1 // pred_check_branch
      %34 = sbr.rel (0) target = $region13
    $region12: #{tpu_custom_call.1} parent=1 // pred_region
      %s36 = ssub.s32 128, 128
      %37 = vsyncadd [#allocation6], %s36
      %s39 = sshll.u32 [#allocation7], 4
      %s40 = int_to_ptr.vmem [resolvable:$true] %s39
      %42 = dma.hbm_to_vmem [thread:$0]  %s2, 128, %s40, [#allocation6]
    $region13: #{tpu_custom_call.1} parent=1 // pred_fallthru
      _
    // Predicated region
    $region14: #{tpu_custom_call.1} parent=1 // pred_check
      _
    $region15: #{tpu_custom_call.1} parent=1 // pred_check_branch
      %44 = sbr.rel (0) target = $region17
    $region16: #{tpu_custom_call.1} parent=1 // pred_region
      %45 = dma.done [#allocation3], 384
    $region17: #{tpu_custom_call.1} parent=1 // pred_fallthru
      _
    // Predicated region
    $region18: #{tpu_custom_call.1} parent=1 // pred_check
      _
    $region19: #{tpu_custom_call.1} parent=1 // pred_check_branch
      %47 = sbr.rel (0) target = $region21
    $region20: #{tpu_custom_call.1} parent=1 // pred_region
      %48 = dma.done [#allocation6], 256
    $region21: #{tpu_custom_call.1} parent=1 // pred_fallthru
      _
    // Predicated region
    $region22: #{tpu_custom_call.1} parent=1 // pred_check
      _
    $region23: #{tpu_custom_call.1} parent=1 // pred_check_branch
      %50 = sbr.rel (0) target = $region25
    $region24: #{tpu_custom_call.1} parent=1 // pred_region
      %51 = dma.done [#allocation6], 128
    $region25: #{tpu_custom_call.1} parent=1 // pred_fallthru
      _
    %v53 = vld [vmem:[#allocation5] sm:$0xff]
    %v54 = vld [vmem:[#allocation5 + $0x8] sm:$0xff]
    %v55 = vld [vmem:[#allocation7] sm:$0xff]
    %v56 = vadd.f32 %v53, 1.0
    %v57 = vadd.f32 %v54, 1.0
    %v58 = vmul.f32 %v56, 16.0
    %v59 = vmul.f32 %v57, 16.0
    %v60 = vsub.f32 %v58, 1.0
    %v61 = vsub.f32 %v59, 1.0
    %v62 = vmul.f32 %v60, 0.5
    %v63 = vmul.f32 %v61, 0.5
    %v64 = vround.ne.pseudo %v62
    %v65 = vround.ne.pseudo %v63
    %vm66 = vcmp.ge.f32.partialorder %v64, 0.0
    %vm67 = vcmp.ge.f32.partialorder %v65, 0.0
    %vm68 = vcmp.le.f32.partialorder %v64, 15.0
    %vm69 = vcmp.le.f32.partialorder %v65, 15.0
    %vm70 = vmand %vm66, %vm68
    %vm71 = vmand %vm67, %vm69
    %v72 = vsel %vm66, 1, 0
    %v73 = vsel %vm67, 1, 0
    %v74 = vrot.slane %v72, 7
    %v75 = vrot.slane %v74, 2
    %v76 = vrot.slane %v73, 7
    %v77 = vrot.slane %v76, 2
    %vm78 = vcmp.ne.s32.totalorder %v75, 0
    %vm79 = vcmp.ne.s32.totalorder %v77, 0
    %vm80 = vmand %vm70, %vm78
    %vm81 = vmand %vm71, %vm79
    %v82 = vsel %vm68, 1, 0
    %v83 = vsel %vm69, 1, 0
    %v84 = vrot.slane %v82, 7
    %v85 = vrot.slane %v84, 2
    %v86 = vrot.slane %v83, 7
    %v87 = vrot.slane %v86, 2
    %vm88 = vcmp.ne.s32.totalorder %v85, 0
    %vm89 = vcmp.ne.s32.totalorder %v87, 0
    %vm90 = vmand %vm80, %vm88
    %vm91 = vmand %vm81, %vm89
    %v92 = vmax.f32 %v64, 0.0
    %v93 = vmax.f32 %v65, 0.0
    %v94 = vmin.f32 %v92, 15.0
    %v95 = vmin.f32 %v93, 15.0
    %v96 = vcvt.f32.s32.to.zero.pseudo %v94
    %v97 = vcvt.f32.s32.to.zero.pseudo %v95
    %v98 = vlaneseq
    %v99 = vshrl.u32 %v98, 7
    %v100 = vadd.s32 %v99, 8
    %v101 = vlaneseq
    %v102 = vshrl.u32 %v101, 7
    %v103 = vsub.s32 0, %v102
    %v104 = vrot.slane %v96, %v103
    %v105 = vlaneseq
    %v106 = vshrl.u32 %v105, 7
    %v107 = vsub.s32 2, %v106
    %v108 = vrot.slane %v96, %v107
    %v109 = vlaneseq
    %v110 = vshrl.u32 %v109, 7
    %v111 = vsub.s32 4, %v110
    %v112 = vrot.slane %v96, %v111
    %v113 = vlaneseq
    %v114 = vshrl.u32 %v113, 7
    %v115 = vsub.s32 6, %v114
    %v116 = vrot.slane %v96, %v115
    %v117 = vlaneseq
    %v118 = vshrl.u32 %v117, 7
    %v119 = vsub.s32 0, %v118
    %v120 = vrot.slane %v97, %v119
    %v121 = vlaneseq
    %v122 = vshrl.u32 %v121, 7
    %v123 = vsub.s32 2, %v122
    %v124 = vrot.slane %v97, %v123
    %v125 = vlaneseq
    %v126 = vshrl.u32 %v125, 7
    %v127 = vsub.s32 4, %v126
    %v128 = vrot.slane %v97, %v127
    %v129 = vlaneseq
    %v130 = vshrl.u32 %v129, 7
    %v131 = vsub.s32 6, %v130
    %v132 = vrot.slane %v97, %v131
    %v133 = vlaneseq
    %v134 = vshrl.u32 %v133, 7
    %v135 = vsub.s32 0, %v134
    %v136 = vrot.slane %v104, %v135
    %v137 = vlaneseq
    %v138 = vshrl.u32 %v137, 7
    %v139 = vsub.s32 0, %v138
    %v140 = vrot.slane %v108, %v139
    %v141 = vlaneseq
    %v142 = vshrl.u32 %v141, 7
    %v143 = vsub.s32 0, %v142
    %v144 = vrot.slane %v112, %v143
    %v145 = vlaneseq
    %v146 = vshrl.u32 %v145, 7
    %v147 = vsub.s32 0, %v146
    %v148 = vrot.slane %v116, %v147
    %v149 = vlaneseq
    %v150 = vshrl.u32 %v149, 7
    %v151 = vsub.s32 0, %v150
    %v152 = vrot.slane %v120, %v151
    %v153 = vlaneseq
    %v154 = vshrl.u32 %v153, 7
    %v155 = vsub.s32 0, %v154
    %v156 = vrot.slane %v124, %v155
    %v157 = vlaneseq
    %v158 = vshrl.u32 %v157, 7
    %v159 = vsub.s32 0, %v158
    %v160 = vrot.slane %v128, %v159
    %v161 = vlaneseq
    %v162 = vshrl.u32 %v161, 7
    %v163 = vsub.s32 0, %v162
    %v164 = vrot.slane %v132, %v163
    %vm165 = vcmp.eq.s32.totalorder %v99, %v136
    %vm166 = vcmp.eq.s32.totalorder %v99, %v140
    %vm167 = vcmp.eq.s32.totalorder %v99, %v144
    %vm168 = vcmp.eq.s32.totalorder %v99, %v148
    %vm169 = vcmp.eq.s32.totalorder %v99, %v152
    %vm170 = vcmp.eq.s32.totalorder %v99, %v156
    %vm171 = vcmp.eq.s32.totalorder %v99, %v160
    %vm172 = vcmp.eq.s32.totalorder %v99, %v164
    %vm173 = vcmp.eq.s32.totalorder %v100, %v136
    %vm174 = vcmp.eq.s32.totalorder %v100, %v140
    %vm175 = vcmp.eq.s32.totalorder %v100, %v144
    %vm176 = vcmp.eq.s32.totalorder %v100, %v148
    %vm177 = vcmp.eq.s32.totalorder %v100, %v152
    %vm178 = vcmp.eq.s32.totalorder %v100, %v156
    %vm179 = vcmp.eq.s32.totalorder %v100, %v160
    %vm180 = vcmp.eq.s32.totalorder %v100, %v164
    %v181 = vsel %vm165, 1.0, 0.0
    %v182 = vsel %vm166, 1.0, 0.0
    %v183 = vsel %vm167, 1.0, 0.0
    %v184 = vsel %vm168, 1.0, 0.0
    %v185 = vsel %vm169, 1.0, 0.0
    %v186 = vsel %vm170, 1.0, 0.0
    %v187 = vsel %vm171, 1.0, 0.0
    %v188 = vsel %vm172, 1.0, 0.0
    %v189 = vsel %vm173, 1.0, 0.0
    %v190 = vsel %vm174, 1.0, 0.0
    %v191 = vsel %vm175, 1.0, 0.0
    %v192 = vsel %vm176, 1.0, 0.0
    %v193 = vsel %vm177, 1.0, 0.0
    %v194 = vsel %vm178, 1.0, 0.0
    %v195 = vsel %vm179, 1.0, 0.0
    %v196 = vsel %vm180, 1.0, 0.0
    %v197 = vpack.c.bf16 %v189, %v181
    %v198 = vpack.c.bf16 %v190, %v182
    %v199 = vpack.c.bf16 %v191, %v183
    %v200 = vpack.c.bf16 %v192, %v184
    %v201 = vpack.c.bf16 %v193, %v185
    %v202 = vpack.c.bf16 %v194, %v186
    %v203 = vpack.c.bf16 %v195, %v187
    %v204 = vpack.c.bf16 %v196, %v188
    %v205 = vld [vmem:[#allocation2] sm:$0xf]
    %v206 = vld [vmem:[#allocation2 + $0x4] sm:$0xf]
    %s207 = scalar_lea.vmem [#allocation2], 8
    %v208 = vld [vmem:[%s207] sm:$0xf]
    %v209 = vld [vmem:[%s207 + $0x4] sm:$0xf]
    %v212 = vunpack.c.l.b16 %v208
    %v213 = vunpack.c.l.b16 %v209
    %v214 = vpack.c.b16 %v213, %v212
    %vm215 = vcmask 130048
    %v217 = vsel %vm215, %v214, 0
    %219 = vmatprep.subr.bf16.mxu0 %v198
    %220 = vmatpush1.bf16.msra.mxu0 %v197
    %221 = vmatprep.subr.bf16.mxu0 0
    %222 = vmatpush1.bf16.msra.mxu0 0
    %223 = vmatprep.subr.bf16.mxu0 0
    %224 = vmatpush1.bf16.msra.mxu0 0
    %225 = vmatprep.subr.bf16.mxu0 0
    %226 = vmatpush1.bf16.msra.mxu0 0
    %227 = vmatprep.subr.bf16.mxu0 0
    %228 = vmatpush1.bf16.msra.mxu0 0
    %229 = vmatprep.subr.bf16.mxu0 0
    %230 = vmatpush1.bf16.msra.mxu0 0
    %231 = vmatprep.subr.bf16.mxu0 0
    %232 = vmatpush1.bf16.msra.mxu0 0
    %233 = vmatprep.subr.bf16.mxu0 0
    %234 = vmatpush1.bf16.msra.mxu0 0
    %235 = vmatprep.subr.bf16.mxu0 0
    %236 = vmatpush1.bf16.msra.mxu0 0
    %237 = vmatprep.subr.bf16.mxu0 0
    %238 = vmatpush1.bf16.msra.mxu0 0
    %239 = vmatprep.subr.bf16.mxu0 0
    %240 = vmatpush1.bf16.msra.mxu0 0
    %241 = vmatprep.subr.bf16.mxu0 0
    %242 = vmatpush1.bf16.msra.mxu0 0
    %243 = vmatprep.subr.bf16.mxu0 0
    %244 = vmatpush1.bf16.msra.mxu0 0
    %245 = vmatprep.subr.bf16.mxu0 0
    %246 = vmatpush1.bf16.msra.mxu0 0
    %247 = vmatprep.subr.bf16.mxu0 0
    %248 = vmatpush1.bf16.msra.mxu0 0
    %249 = vmatprep.subr.bf16.mxu0 0
    %250 = vmatpush1.bf16.msra.mxu0 0
    %251 = vmatprep.mubr.bf16.mxu0 0
    %252 = vmatmul.mubr.bf16.gmra.mrb[0].mxu0 %v217
    %v253 = vpop.f32.mrb[0].mxu0
    %v254 = vadd.f32 0.0, %v253
    %v255 = vpop.f32.mrb[0].mxu0
    %v256 = vadd.f32 0.0, %v255
    %v257 = vpop.f32.mrb[0].mxu0
    %v258 = vadd.f32 0.0, %v257
    %v259 = vpop.f32.mrb[0].mxu0
    %v260 = vadd.f32 0.0, %v259
    %261 = vdwg.mxu0
    %262 = vmatprep.subr.bf16.mxu0 %v200
    %263 = vmatpush1.bf16.msra.mxu0 %v199
    %264 = vmatprep.subr.bf16.mxu0 0
    %265 = vmatpush1.bf16.msra.mxu0 0
    %266 = vmatprep.subr.bf16.mxu0 0
    %267 = vmatpush1.bf16.msra.mxu0 0
    %268 = vmatprep.subr.bf16.mxu0 0
    %269 = vmatpush1.bf16.msra.mxu0 0
    %270 = vmatprep.subr.bf16.mxu0 0
    %271 = vmatpush1.bf16.msra.mxu0 0
    %272 = vmatprep.subr.bf16.mxu0 0
    %273 = vmatpush1.bf16.msra.mxu0 0
    %274 = vmatprep.subr.bf16.mxu0 0
    %275 = vmatpush1.bf16.msra.mxu0 0
    %276 = vmatprep.subr.bf16.mxu0 0
    %277 = vmatpush1.bf16.msra.mxu0 0
    %278 = vmatprep.subr.bf16.mxu0 0
    %279 = vmatpush1.bf16.msra.mxu0 0
    %280 = vmatprep.subr.bf16.mxu0 0
    %281 = vmatpush1.bf16.msra.mxu0 0
    %282 = vmatprep.subr.bf16.mxu0 0
    %283 = vmatpush1.bf16.msra.mxu0 0
    %284 = vmatprep.subr.bf16.mxu0 0
    %285 = vmatpush1.bf16.msra.mxu0 0
    %286 = vmatprep.subr.bf16.mxu0 0
    %287 = vmatpush1.bf16.msra.mxu0 0
    %288 = vmatprep.subr.bf16.mxu0 0
    %289 = vmatpush1.bf16.msra.mxu0 0
    %290 = vmatprep.subr.bf16.mxu0 0
    %291 = vmatpush1.bf16.msra.mxu0 0
    %292 = vmatprep.subr.bf16.mxu0 0
    %293 = vmatpush1.bf16.msra.mxu0 0
    %294 = vmatprep.mubr.bf16.mxu0 0
    %295 = vmatmul.mubr.bf16.gmra.mrb[0].mxu0 %v217
    %v296 = vpop.f32.mrb[0].mxu0
    %v297 = vadd.f32 0.0, %v296
    %v298 = vpop.f32.mrb[0].mxu0
    %v299 = vadd.f32 0.0, %v298
    %v300 = vpop.f32.mrb[0].mxu0
    %v301 = vadd.f32 0.0, %v300
    %v302 = vpop.f32.mrb[0].mxu0
    %v303 = vadd.f32 0.0, %v302
    %304 = vdwg.mxu0
    %305 = vmatprep.subr.bf16.mxu0 %v202
    %306 = vmatpush1.bf16.msra.mxu0 %v201
    %307 = vmatprep.subr.bf16.mxu0 0
    %308 = vmatpush1.bf16.msra.mxu0 0
    %309 = vmatprep.subr.bf16.mxu0 0
    %310 = vmatpush1.bf16.msra.mxu0 0
    %311 = vmatprep.subr.bf16.mxu0 0
    %312 = vmatpush1.bf16.msra.mxu0 0
    %313 = vmatprep.subr.bf16.mxu0 0
    %314 = vmatpush1.bf16.msra.mxu0 0
    %315 = vmatprep.subr.bf16.mxu0 0
    %316 = vmatpush1.bf16.msra.mxu0 0
    %317 = vmatprep.subr.bf16.mxu0 0
    %318 = vmatpush1.bf16.msra.mxu0 0
    %319 = vmatprep.subr.bf16.mxu0 0
    %320 = vmatpush1.bf16.msra.mxu0 0
    %321 = vmatprep.subr.bf16.mxu0 0
    %322 = vmatpush1.bf16.msra.mxu0 0
    %323 = vmatprep.subr.bf16.mxu0 0
    %324 = vmatpush1.bf16.msra.mxu0 0
    %325 = vmatprep.subr.bf16.mxu0 0
    %326 = vmatpush1.bf16.msra.mxu0 0
    %327 = vmatprep.subr.bf16.mxu0 0
    %328 = vmatpush1.bf16.msra.mxu0 0
    %329 = vmatprep.subr.bf16.mxu0 0
    %330 = vmatpush1.bf16.msra.mxu0 0
    %331 = vmatprep.subr.bf16.mxu0 0
    %332 = vmatpush1.bf16.msra.mxu0 0
    %333 = vmatprep.subr.bf16.mxu0 0
    %334 = vmatpush1.bf16.msra.mxu0 0
    %335 = vmatprep.subr.bf16.mxu0 0
    %336 = vmatpush1.bf16.msra.mxu0 0
    %337 = vmatprep.mubr.bf16.mxu0 0
    %338 = vmatmul.mubr.bf16.gmra.mrb[0].mxu0 %v217
    %v339 = vpop.f32.mrb[0].mxu0
    %v340 = vadd.f32 0.0, %v339
    %v341 = vpop.f32.mrb[0].mxu0
    %v342 = vadd.f32 0.0, %v341
    %v343 = vpop.f32.mrb[0].mxu0
    %v344 = vadd.f32 0.0, %v343
    %v345 = vpop.f32.mrb[0].mxu0
    %v346 = vadd.f32 0.0, %v345
    %347 = vdwg.mxu0
    %348 = vmatprep.subr.bf16.mxu0 %v204
    %349 = vmatpush1.bf16.msra.mxu0 %v203
    %350 = vmatprep.subr.bf16.mxu0 0
    %351 = vmatpush1.bf16.msra.mxu0 0
    %352 = vmatprep.subr.bf16.mxu0 0
    %353 = vmatpush1.bf16.msra.mxu0 0
    %354 = vmatprep.subr.bf16.mxu0 0
    %355 = vmatpush1.bf16.msra.mxu0 0
    %356 = vmatprep.subr.bf16.mxu0 0
    %357 = vmatpush1.bf16.msra.mxu0 0
    %358 = vmatprep.subr.bf16.mxu0 0
    %359 = vmatpush1.bf16.msra.mxu0 0
    %360 = vmatprep.subr.bf16.mxu0 0
    %361 = vmatpush1.bf16.msra.mxu0 0
    %362 = vmatprep.subr.bf16.mxu0 0
    %363 = vmatpush1.bf16.msra.mxu0 0
    %364 = vmatprep.subr.bf16.mxu0 0
    %365 = vmatpush1.bf16.msra.mxu0 0
    %366 = vmatprep.subr.bf16.mxu0 0
    %367 = vmatpush1.bf16.msra.mxu0 0
    %368 = vmatprep.subr.bf16.mxu0 0
    %369 = vmatpush1.bf16.msra.mxu0 0
    %370 = vmatprep.subr.bf16.mxu0 0
    %371 = vmatpush1.bf16.msra.mxu0 0
    %372 = vmatprep.subr.bf16.mxu0 0
    %373 = vmatpush1.bf16.msra.mxu0 0
    %374 = vmatprep.subr.bf16.mxu0 0
    %375 = vmatpush1.bf16.msra.mxu0 0
    %376 = vmatprep.subr.bf16.mxu0 0
    %377 = vmatpush1.bf16.msra.mxu0 0
    %378 = vmatprep.subr.bf16.mxu0 0
    %379 = vmatpush1.bf16.msra.mxu0 0
    %380 = vmatprep.mubr.bf16.mxu0 0
    %381 = vmatmul.mubr.bf16.gmra.mrb[0].mxu0 %v217
    %v382 = vpop.f32.mrb[0].mxu0
    %v383 = vadd.f32 0.0, %v382
    %v384 = vpop.f32.mrb[0].mxu0
    %v385 = vadd.f32 0.0, %v384
    %v386 = vpop.f32.mrb[0].mxu0
    %v387 = vadd.f32 0.0, %v386
    %v388 = vpop.f32.mrb[0].mxu0
    %v389 = vadd.f32 0.0, %v388
    %390 = vdwg.mxu0
    %v393 = vunpack.c.l.b16 %v205
    %v394 = vunpack.c.l.b16 %v206
    %v395 = vpack.c.b16 %v394, %v393
    %v397 = vsel %vm215, %v395, 0
    %399 = vmatprep.subr.bf16.mxu0 %v198
    %400 = vmatpush1.bf16.msra.mxu0 %v197
    %401 = vmatprep.subr.bf16.mxu0 0
    %402 = vmatpush1.bf16.msra.mxu0 0
    %403 = vmatprep.subr.bf16.mxu0 0
    %404 = vmatpush1.bf16.msra.mxu0 0
    %405 = vmatprep.subr.bf16.mxu0 0
    %406 = vmatpush1.bf16.msra.mxu0 0
    %407 = vmatprep.subr.bf16.mxu0 0
    %408 = vmatpush1.bf16.msra.mxu0 0
    %409 = vmatprep.subr.bf16.mxu0 0
    %410 = vmatpush1.bf16.msra.mxu0 0
    %411 = vmatprep.subr.bf16.mxu0 0
    %412 = vmatpush1.bf16.msra.mxu0 0
    %413 = vmatprep.subr.bf16.mxu0 0
    %414 = vmatpush1.bf16.msra.mxu0 0
    %415 = vmatprep.subr.bf16.mxu0 0
    %416 = vmatpush1.bf16.msra.mxu0 0
    %417 = vmatprep.subr.bf16.mxu0 0
    %418 = vmatpush1.bf16.msra.mxu0 0
    %419 = vmatprep.subr.bf16.mxu0 0
    %420 = vmatpush1.bf16.msra.mxu0 0
    %421 = vmatprep.subr.bf16.mxu0 0
    %422 = vmatpush1.bf16.msra.mxu0 0
    %423 = vmatprep.subr.bf16.mxu0 0
    %424 = vmatpush1.bf16.msra.mxu0 0
    %425 = vmatprep.subr.bf16.mxu0 0
    %426 = vmatpush1.bf16.msra.mxu0 0
    %427 = vmatprep.subr.bf16.mxu0 0
    %428 = vmatpush1.bf16.msra.mxu0 0
    %429 = vmatprep.subr.bf16.mxu0 0
    %430 = vmatpush1.bf16.msra.mxu0 0
    %431 = vmatprep.mubr.bf16.mxu0 0
    %432 = vmatmul.mubr.bf16.gmra.mrb[0].mxu0 %v397
    %v433 = vpop.f32.mrb[0].mxu0
    %v434 = vadd.f32 %v254, %v433
    %v435 = vpop.f32.mrb[0].mxu0
    %v436 = vadd.f32 %v256, %v435
    %v437 = vpop.f32.mrb[0].mxu0
    %v438 = vadd.f32 %v258, %v437
    %v439 = vpop.f32.mrb[0].mxu0
    %v440 = vadd.f32 %v260, %v439
    %441 = vdwg.mxu0
    %442 = vmatprep.subr.bf16.mxu0 %v200
    %443 = vmatpush1.bf16.msra.mxu0 %v199
    %444 = vmatprep.subr.bf16.mxu0 0
    %445 = vmatpush1.bf16.msra.mxu0 0
    %446 = vmatprep.subr.bf16.mxu0 0
    %447 = vmatpush1.bf16.msra.mxu0 0
    %448 = vmatprep.subr.bf16.mxu0 0
    %449 = vmatpush1.bf16.msra.mxu0 0
    %450 = vmatprep.subr.bf16.mxu0 0
    %451 = vmatpush1.bf16.msra.mxu0 0
    %452 = vmatprep.subr.bf16.mxu0 0
    %453 = vmatpush1.bf16.msra.mxu0 0
    %454 = vmatprep.subr.bf16.mxu0 0
    %455 = vmatpush1.bf16.msra.mxu0 0
    %456 = vmatprep.subr.bf16.mxu0 0
    %457 = vmatpush1.bf16.msra.mxu0 0
    %458 = vmatprep.subr.bf16.mxu0 0
    %459 = vmatpush1.bf16.msra.mxu0 0
    %460 = vmatprep.subr.bf16.mxu0 0
    %461 = vmatpush1.bf16.msra.mxu0 0
    %462 = vmatprep.subr.bf16.mxu0 0
    %463 = vmatpush1.bf16.msra.mxu0 0
    %464 = vmatprep.subr.bf16.mxu0 0
    %465 = vmatpush1.bf16.msra.mxu0 0
    %466 = vmatprep.subr.bf16.mxu0 0
    %467 = vmatpush1.bf16.msra.mxu0 0
    %468 = vmatprep.subr.bf16.mxu0 0
    %469 = vmatpush1.bf16.msra.mxu0 0
    %470 = vmatprep.subr.bf16.mxu0 0
    %471 = vmatpush1.bf16.msra.mxu0 0
    %472 = vmatprep.subr.bf16.mxu0 0
    %473 = vmatpush1.bf16.msra.mxu0 0
    %474 = vmatprep.mubr.bf16.mxu0 0
    %475 = vmatmul.mubr.bf16.gmra.mrb[0].mxu0 %v397
    %v476 = vpop.f32.mrb[0].mxu0
    %v477 = vadd.f32 %v297, %v476
    %v478 = vpop.f32.mrb[0].mxu0
    %v479 = vadd.f32 %v299, %v478
    %v480 = vpop.f32.mrb[0].mxu0
    %v481 = vadd.f32 %v301, %v480
    %v482 = vpop.f32.mrb[0].mxu0
    %v483 = vadd.f32 %v303, %v482
    %484 = vdwg.mxu0
    %485 = vmatprep.subr.bf16.mxu0 %v202
    %486 = vmatpush1.bf16.msra.mxu0 %v201
    %487 = vmatprep.subr.bf16.mxu0 0
    %488 = vmatpush1.bf16.msra.mxu0 0
    %489 = vmatprep.subr.bf16.mxu0 0
    %490 = vmatpush1.bf16.msra.mxu0 0
    %491 = vmatprep.subr.bf16.mxu0 0
    %492 = vmatpush1.bf16.msra.mxu0 0
    %493 = vmatprep.subr.bf16.mxu0 0
    %494 = vmatpush1.bf16.msra.mxu0 0
    %495 = vmatprep.subr.bf16.mxu0 0
    %496 = vmatpush1.bf16.msra.mxu0 0
    %497 = vmatprep.subr.bf16.mxu0 0
    %498 = vmatpush1.bf16.msra.mxu0 0
    %499 = vmatprep.subr.bf16.mxu0 0
    %500 = vmatpush1.bf16.msra.mxu0 0
    %501 = vmatprep.subr.bf16.mxu0 0
    %502 = vmatpush1.bf16.msra.mxu0 0
    %503 = vmatprep.subr.bf16.mxu0 0
    %504 = vmatpush1.bf16.msra.mxu0 0
    %505 = vmatprep.subr.bf16.mxu0 0
    %506 = vmatpush1.bf16.msra.mxu0 0
    %507 = vmatprep.subr.bf16.mxu0 0
    %508 = vmatpush1.bf16.msra.mxu0 0
    %509 = vmatprep.subr.bf16.mxu0 0
    %510 = vmatpush1.bf16.msra.mxu0 0
    %511 = vmatprep.subr.bf16.mxu0 0
    %512 = vmatpush1.bf16.msra.mxu0 0
    %513 = vmatprep.subr.bf16.mxu0 0
    %514 = vmatpush1.bf16.msra.mxu0 0
    %515 = vmatprep.subr.bf16.mxu0 0
    %516 = vmatpush1.bf16.msra.mxu0 0
    %517 = vmatprep.mubr.bf16.mxu0 0
    %518 = vmatmul.mubr.bf16.gmra.mrb[0].mxu0 %v397
    %v519 = vpop.f32.mrb[0].mxu0
    %v520 = vadd.f32 %v340, %v519
    %v521 = vpop.f32.mrb[0].mxu0
    %v522 = vadd.f32 %v342, %v521
    %v523 = vpop.f32.mrb[0].mxu0
    %v524 = vadd.f32 %v344, %v523
    %v525 = vpop.f32.mrb[0].mxu0
    %v526 = vadd.f32 %v346, %v525
    %527 = vdwg.mxu0
    %528 = vmatprep.subr.bf16.mxu0 %v204
    %529 = vmatpush1.bf16.msra.mxu0 %v203
    %530 = vmatprep.subr.bf16.mxu0 0
    %531 = vmatpush1.bf16.msra.mxu0 0
    %532 = vmatprep.subr.bf16.mxu0 0
    %533 = vmatpush1.bf16.msra.mxu0 0
    %534 = vmatprep.subr.bf16.mxu0 0
    %535 = vmatpush1.bf16.msra.mxu0 0
    %536 = vmatprep.subr.bf16.mxu0 0
    %537 = vmatpush1.bf16.msra.mxu0 0
    %538 = vmatprep.subr.bf16.mxu0 0
    %539 = vmatpush1.bf16.msra.mxu0 0
    %540 = vmatprep.subr.bf16.mxu0 0
    %541 = vmatpush1.bf16.msra.mxu0 0
    %542 = vmatprep.subr.bf16.mxu0 0
    %543 = vmatpush1.bf16.msra.mxu0 0
    %544 = vmatprep.subr.bf16.mxu0 0
    %545 = vmatpush1.bf16.msra.mxu0 0
    %546 = vmatprep.subr.bf16.mxu0 0
    %547 = vmatpush1.bf16.msra.mxu0 0
    %548 = vmatprep.subr.bf16.mxu0 0
    %549 = vmatpush1.bf16.msra.mxu0 0
    %550 = vmatprep.subr.bf16.mxu0 0
    %551 = vmatpush1.bf16.msra.mxu0 0
    %552 = vmatprep.subr.bf16.mxu0 0
    %553 = vmatpush1.bf16.msra.mxu0 0
    %554 = vmatprep.subr.bf16.mxu0 0
    %555 = vmatpush1.bf16.msra.mxu0 0
    %556 = vmatprep.subr.bf16.mxu0 0
    %557 = vmatpush1.bf16.msra.mxu0 0
    %558 = vmatprep.subr.bf16.mxu0 0
    %559 = vmatpush1.bf16.msra.mxu0 0
    %560 = vmatprep.mubr.bf16.mxu0 0
    %561 = vmatmul.mubr.bf16.gmra.mrb[0].mxu0 %v397
    %v562 = vpop.f32.mrb[0].mxu0
    %v563 = vadd.f32 %v383, %v562
    %v564 = vpop.f32.mrb[0].mxu0
    %v565 = vadd.f32 %v385, %v564
    %v566 = vpop.f32.mrb[0].mxu0
    %v567 = vadd.f32 %v387, %v566
    %v568 = vpop.f32.mrb[0].mxu0
    %v569 = vadd.f32 %v389, %v568
    %570 = vdwg.mxu0
    %s571 = scalar_lea.vmem [#allocation2], 16
    %v572 = vld [vmem:[%s571] sm:$0xf]
    %v573 = vld [vmem:[%s571 + $0x4] sm:$0xf]
    %v576 = vunpack.c.l.b16 %v572
    %v577 = vunpack.c.l.b16 %v573
    %v578 = vpack.c.b16 %v577, %v576
    %v580 = vsel %vm215, %v578, 0
    %582 = vmatprep.subr.bf16.mxu0 %v198
    %583 = vmatpush1.bf16.msra.mxu0 %v197
    %584 = vmatprep.subr.bf16.mxu0 0
    %585 = vmatpush1.bf16.msra.mxu0 0
    %586 = vmatprep.subr.bf16.mxu0 0
    %587 = vmatpush1.bf16.msra.mxu0 0
    %588 = vmatprep.subr.bf16.mxu0 0
    %589 = vmatpush1.bf16.msra.mxu0 0
    %590 = vmatprep.subr.bf16.mxu0 0
    %591 = vmatpush1.bf16.msra.mxu0 0
    %592 = vmatprep.subr.bf16.mxu0 0
    %593 = vmatpush1.bf16.msra.mxu0 0
    %594 = vmatprep.subr.bf16.mxu0 0
    %595 = vmatpush1.bf16.msra.mxu0 0
    %596 = vmatprep.subr.bf16.mxu0 0
    %597 = vmatpush1.bf16.msra.mxu0 0
    %598 = vmatprep.subr.bf16.mxu0 0
    %599 = vmatpush1.bf16.msra.mxu0 0
    %600 = vmatprep.subr.bf16.mxu0 0
    %601 = vmatpush1.bf16.msra.mxu0 0
    %602 = vmatprep.subr.bf16.mxu0 0
    %603 = vmatpush1.bf16.msra.mxu0 0
    %604 = vmatprep.subr.bf16.mxu0 0
    %605 = vmatpush1.bf16.msra.mxu0 0
    %606 = vmatprep.subr.bf16.mxu0 0
    %607 = vmatpush1.bf16.msra.mxu0 0
    %608 = vmatprep.subr.bf16.mxu0 0
    %609 = vmatpush1.bf16.msra.mxu0 0
    %610 = vmatprep.subr.bf16.mxu0 0
    %611 = vmatpush1.bf16.msra.mxu0 0
    %612 = vmatprep.subr.bf16.mxu0 0
    %613 = vmatpush1.bf16.msra.mxu0 0
    %614 = vmatprep.mubr.bf16.mxu0 0
    %615 = vmatmul.mubr.bf16.gmra.mrb[0].mxu0 %v580
    %v616 = vpop.f32.mrb[0].mxu0
    %v617 = vadd.f32 0.0, %v616
    %v618 = vpop.f32.mrb[0].mxu0
    %v619 = vadd.f32 0.0, %v618
    %v620 = vpop.f32.mrb[0].mxu0
    %v621 = vadd.f32 0.0, %v620
    %v622 = vpop.f32.mrb[0].mxu0
    %v623 = vadd.f32 0.0, %v622
    %624 = vdwg.mxu0
    %625 = vmatprep.subr.bf16.mxu0 %v200
    %626 = vmatpush1.bf16.msra.mxu0 %v199
    %627 = vmatprep.subr.bf16.mxu0 0
    %628 = vmatpush1.bf16.msra.mxu0 0
    %629 = vmatprep.subr.bf16.mxu0 0
    %630 = vmatpush1.bf16.msra.mxu0 0
    %631 = vmatprep.subr.bf16.mxu0 0
    %632 = vmatpush1.bf16.msra.mxu0 0
    %633 = vmatprep.subr.bf16.mxu0 0
    %634 = vmatpush1.bf16.msra.mxu0 0
    %635 = vmatprep.subr.bf16.mxu0 0
    %636 = vmatpush1.bf16.msra.mxu0 0
    %637 = vmatprep.subr.bf16.mxu0 0
    %638 = vmatpush1.bf16.msra.mxu0 0
    %639 = vmatprep.subr.bf16.mxu0 0
    %640 = vmatpush1.bf16.msra.mxu0 0
    %641 = vmatprep.subr.bf16.mxu0 0
    %642 = vmatpush1.bf16.msra.mxu0 0
    %643 = vmatprep.subr.bf16.mxu0 0
    %644 = vmatpush1.bf16.msra.mxu0 0
    %645 = vmatprep.subr.bf16.mxu0 0
    %646 = vmatpush1.bf16.msra.mxu0 0
    %647 = vmatprep.subr.bf16.mxu0 0
    %648 = vmatpush1.bf16.msra.mxu0 0
    %649 = vmatprep.subr.bf16.mxu0 0
    %650 = vmatpush1.bf16.msra.mxu0 0
    %651 = vmatprep.subr.bf16.mxu0 0
    %652 = vmatpush1.bf16.msra.mxu0 0
    %653 = vmatprep.subr.bf16.mxu0 0
    %654 = vmatpush1.bf16.msra.mxu0 0
    %655 = vmatprep.subr.bf16.mxu0 0
    %656 = vmatpush1.bf16.msra.mxu0 0
    %657 = vmatprep.mubr.bf16.mxu0 0
    %658 = vmatmul.mubr.bf16.gmra.mrb[0].mxu0 %v580
    %v659 = vpop.f32.mrb[0].mxu0
    %v660 = vadd.f32 0.0, %v659
    %v661 = vpop.f32.mrb[0].mxu0
    %v662 = vadd.f32 0.0, %v661
    %v663 = vpop.f32.mrb[0].mxu0
    %v664 = vadd.f32 0.0, %v663
    %v665 = vpop.f32.mrb[0].mxu0
    %v666 = vadd.f32 0.0, %v665
    %667 = vdwg.mxu0
    %668 = vmatprep.subr.bf16.mxu0 %v202
    %669 = vmatpush1.bf16.msra.mxu0 %v201
    %670 = vmatprep.subr.bf16.mxu0 0
    %671 = vmatpush1.bf16.msra.mxu0 0
    %672 = vmatprep.subr.bf16.mxu0 0
    %673 = vmatpush1.bf16.msra.mxu0 0
    %674 = vmatprep.subr.bf16.mxu0 0
    %675 = vmatpush1.bf16.msra.mxu0 0
    %676 = vmatprep.subr.bf16.mxu0 0
    %677 = vmatpush1.bf16.msra.mxu0 0
    %678 = vmatprep.subr.bf16.mxu0 0
    %679 = vmatpush1.bf16.msra.mxu0 0
    %680 = vmatprep.subr.bf16.mxu0 0
    %681 = vmatpush1.bf16.msra.mxu0 0
    %682 = vmatprep.subr.bf16.mxu0 0
    %683 = vmatpush1.bf16.msra.mxu0 0
    %684 = vmatprep.subr.bf16.mxu0 0
    %685 = vmatpush1.bf16.msra.mxu0 0
    %686 = vmatprep.subr.bf16.mxu0 0
    %687 = vmatpush1.bf16.msra.mxu0 0
    %688 = vmatprep.subr.bf16.mxu0 0
    %689 = vmatpush1.bf16.msra.mxu0 0
    %690 = vmatprep.subr.bf16.mxu0 0
    %691 = vmatpush1.bf16.msra.mxu0 0
    %692 = vmatprep.subr.bf16.mxu0 0
    %693 = vmatpush1.bf16.msra.mxu0 0
    %694 = vmatprep.subr.bf16.mxu0 0
    %695 = vmatpush1.bf16.msra.mxu0 0
    %696 = vmatprep.subr.bf16.mxu0 0
    %697 = vmatpush1.bf16.msra.mxu0 0
    %698 = vmatprep.subr.bf16.mxu0 0
    %699 = vmatpush1.bf16.msra.mxu0 0
    %700 = vmatprep.mubr.bf16.mxu0 0
    %701 = vmatmul.mubr.bf16.gmra.mrb[0].mxu0 %v580
    %v702 = vpop.f32.mrb[0].mxu0
    %v703 = vadd.f32 0.0, %v702
    %v704 = vpop.f32.mrb[0].mxu0
    %v705 = vadd.f32 0.0, %v704
    %v706 = vpop.f32.mrb[0].mxu0
    %v707 = vadd.f32 0.0, %v706
    %v708 = vpop.f32.mrb[0].mxu0
    %v709 = vadd.f32 0.0, %v708
    %710 = vdwg.mxu0
    %711 = vmatprep.subr.bf16.mxu0 %v204
    %712 = vmatpush1.bf16.msra.mxu0 %v203
    %713 = vmatprep.subr.bf16.mxu0 0
    %714 = vmatpush1.bf16.msra.mxu0 0
    %715 = vmatprep.subr.bf16.mxu0 0
    %716 = vmatpush1.bf16.msra.mxu0 0
    %717 = vmatprep.subr.bf16.mxu0 0
    %718 = vmatpush1.bf16.msra.mxu0 0
    %719 = vmatprep.subr.bf16.mxu0 0
    %720 = vmatpush1.bf16.msra.mxu0 0
    %721 = vmatprep.subr.bf16.mxu0 0
    %722 = vmatpush1.bf16.msra.mxu0 0
    %723 = vmatprep.subr.bf16.mxu0 0
    %724 = vmatpush1.bf16.msra.mxu0 0
    %725 = vmatprep.subr.bf16.mxu0 0
    %726 = vmatpush1.bf16.msra.mxu0 0
    %727 = vmatprep.subr.bf16.mxu0 0
    %728 = vmatpush1.bf16.msra.mxu0 0
    %729 = vmatprep.subr.bf16.mxu0 0
    %730 = vmatpush1.bf16.msra.mxu0 0
    %731 = vmatprep.subr.bf16.mxu0 0
    %732 = vmatpush1.bf16.msra.mxu0 0
    %733 = vmatprep.subr.bf16.mxu0 0
    %734 = vmatpush1.bf16.msra.mxu0 0
    %735 = vmatprep.subr.bf16.mxu0 0
    %736 = vmatpush1.bf16.msra.mxu0 0
    %737 = vmatprep.subr.bf16.mxu0 0
    %738 = vmatpush1.bf16.msra.mxu0 0
    %739 = vmatprep.subr.bf16.mxu0 0
    %740 = vmatpush1.bf16.msra.mxu0 0
    %741 = vmatprep.subr.bf16.mxu0 0
    %742 = vmatpush1.bf16.msra.mxu0 0
    %743 = vmatprep.mubr.bf16.mxu0 0
    %744 = vmatmul.mubr.bf16.gmra.mrb[0].mxu0 %v580
    %v745 = vpop.f32.mrb[0].mxu0
    %v746 = vadd.f32 0.0, %v745
    %v747 = vpop.f32.mrb[0].mxu0
    %v748 = vadd.f32 0.0, %v747
    %v749 = vpop.f32.mrb[0].mxu0
    %v750 = vadd.f32 0.0, %v749
    %v751 = vpop.f32.mrb[0].mxu0
    %v752 = vadd.f32 0.0, %v751
    %753 = vdwg.mxu0
    %v754 = vadd.f32 %v434, %v617
    %v755 = vadd.f32 %v436, %v619
    %v756 = vadd.f32 %v477, %v660
    %v757 = vadd.f32 %v479, %v662
    %v758 = vadd.f32 %v520, %v703
    %v759 = vadd.f32 %v522, %v705
    %v760 = vadd.f32 %v563, %v746
    %v761 = vadd.f32 %v565, %v748
    %v762 = vadd.f32 %v438, %v621
    %v763 = vadd.f32 %v440, %v623
    %v764 = vadd.f32 %v481, %v664
    %v765 = vadd.f32 %v483, %v666
    %v766 = vadd.f32 %v524, %v707
    %v767 = vadd.f32 %v526, %v709
    %v768 = vadd.f32 %v567, %v750
    %v769 = vadd.f32 %v569, %v752
    %v770 = vlaneseq
    %v771 = vshrl.u32 %v770, 7
    %v772 = vsub.s32 1, %v771
    %v773 = vrot.slane %v96, %v772
    %v774 = vlaneseq
    %v775 = vshrl.u32 %v774, 7
    %v776 = vsub.s32 3, %v775
    %v777 = vrot.slane %v96, %v776
    %v778 = vlaneseq
    %v779 = vshrl.u32 %v778, 7
    %v780 = vsub.s32 5, %v779
    %v781 = vrot.slane %v96, %v780
    %v782 = vlaneseq
    %v783 = vshrl.u32 %v782, 7
    %v784 = vsub.s32 7, %v783
    %v785 = vrot.slane %v96, %v784
    %v786 = vlaneseq
    %v787 = vshrl.u32 %v786, 7
    %v788 = vsub.s32 1, %v787
    %v789 = vrot.slane %v97, %v788
    %v790 = vlaneseq
    %v791 = vshrl.u32 %v790, 7
    %v792 = vsub.s32 3, %v791
    %v793 = vrot.slane %v97, %v792
    %v794 = vlaneseq
    %v795 = vshrl.u32 %v794, 7
    %v796 = vsub.s32 5, %v795
    %v797 = vrot.slane %v97, %v796
    %v798 = vlaneseq
    %v799 = vshrl.u32 %v798, 7
    %v800 = vsub.s32 7, %v799
    %v801 = vrot.slane %v97, %v800
    %v802 = vlaneseq
    %v803 = vshrl.u32 %v802, 7
    %v804 = vsub.s32 1, %v803
    %v805 = vrot.slane %v773, %v804
    %v806 = vlaneseq
    %v807 = vshrl.u32 %v806, 7
    %v808 = vsub.s32 1, %v807
    %v809 = vrot.slane %v777, %v808
    %v810 = vlaneseq
    %v811 = vshrl.u32 %v810, 7
    %v812 = vsub.s32 1, %v811
    %v813 = vrot.slane %v781, %v812
    %v814 = vlaneseq
    %v815 = vshrl.u32 %v814, 7
    %v816 = vsub.s32 1, %v815
    %v817 = vrot.slane %v785, %v816
    %v818 = vlaneseq
    %v819 = vshrl.u32 %v818, 7
    %v820 = vsub.s32 1, %v819
    %v821 = vrot.slane %v789, %v820
    %v822 = vlaneseq
    %v823 = vshrl.u32 %v822, 7
    %v824 = vsub.s32 1, %v823
    %v825 = vrot.slane %v793, %v824
    %v826 = vlaneseq
    %v827 = vshrl.u32 %v826, 7
    %v828 = vsub.s32 1, %v827
    %v829 = vrot.slane %v797, %v828
    %v830 = vlaneseq
    %v831 = vshrl.u32 %v830, 7
    %v832 = vsub.s32 1, %v831
    %v833 = vrot.slane %v801, %v832
    %vm834 = vcmp.eq.s32.totalorder %v99, %v805
    %vm835 = vcmp.eq.s32.totalorder %v99, %v809
    %vm836 = vcmp.eq.s32.totalorder %v99, %v813
    %vm837 = vcmp.eq.s32.totalorder %v99, %v817
    %vm838 = vcmp.eq.s32.totalorder %v99, %v821
    %vm839 = vcmp.eq.s32.totalorder %v99, %v825
    %vm840 = vcmp.eq.s32.totalorder %v99, %v829
    %vm841 = vcmp.eq.s32.totalorder %v99, %v833
    %vm842 = vcmp.eq.s32.totalorder %v100, %v805
    %vm843 = vcmp.eq.s32.totalorder %v100, %v809
    %vm844 = vcmp.eq.s32.totalorder %v100, %v813
    %vm845 = vcmp.eq.s32.totalorder %v100, %v817
    %vm846 = vcmp.eq.s32.totalorder %v100, %v821
    %vm847 = vcmp.eq.s32.totalorder %v100, %v825
    %vm848 = vcmp.eq.s32.totalorder %v100, %v829
    %vm849 = vcmp.eq.s32.totalorder %v100, %v833
    %v850 = vsel %vm834, %v754, 0.0
    %v851 = vsel %vm835, %v755, 0.0
    %v852 = vsel %vm836, %v756, 0.0
    %v853 = vsel %vm837, %v757, 0.0
    %v854 = vsel %vm838, %v758, 0.0
    %v855 = vsel %vm839, %v759, 0.0
    %v856 = vsel %vm840, %v760, 0.0
    %v857 = vsel %vm841, %v761, 0.0
    %v858 = vsel %vm842, %v762, 0.0
    %v859 = vsel %vm843, %v763, 0.0
    %v860 = vsel %vm844, %v764, 0.0
    %v861 = vsel %vm845, %v765, 0.0
    %v862 = vsel %vm846, %v766, 0.0
    %v863 = vsel %vm847, %v767, 0.0
    %v864 = vsel %vm848, %v768, 0.0
    %v865 = vsel %vm849, %v769, 0.0
    %v866 = vadd.f32 %v850, %v858
    %v867 = vrot.slane %v866, 4
    %v868 = vadd.f32 %v866, %v867
    %v869 = vrot.slane %v868, 2
    %v870 = vadd.f32 %v868, %v869
    %v871 = vrot.slane %v870, 1
    %v872 = vadd.f32 %v870, %v871
    %v873 = vadd.f32 %v851, %v859
    %v874 = vrot.slane %v873, 4
    %v875 = vadd.f32 %v873, %v874
    %v876 = vrot.slane %v875, 2
    %v877 = vadd.f32 %v875, %v876
    %v878 = vrot.slane %v877, 1
    %v879 = vadd.f32 %v877, %v878
    %v880 = vadd.f32 %v852, %v860
    %v881 = vrot.slane %v880, 4
    %v882 = vadd.f32 %v880, %v881
    %v883 = vrot.slane %v882, 2
    %v884 = vadd.f32 %v882, %v883
    %v885 = vrot.slane %v884, 1
    %v886 = vadd.f32 %v884, %v885
    %v887 = vadd.f32 %v853, %v861
    %v888 = vrot.slane %v887, 4
    %v889 = vadd.f32 %v887, %v888
    %v890 = vrot.slane %v889, 2
    %v891 = vadd.f32 %v889, %v890
    %v892 = vrot.slane %v891, 1
    %v893 = vadd.f32 %v891, %v892
    %v894 = vadd.f32 %v854, %v862
    %v895 = vrot.slane %v894, 4
    %v896 = vadd.f32 %v894, %v895
    %v897 = vrot.slane %v896, 2
    %v898 = vadd.f32 %v896, %v897
    %v899 = vrot.slane %v898, 1
    %v900 = vadd.f32 %v898, %v899
    %v901 = vadd.f32 %v855, %v863
    %v902 = vrot.slane %v901, 4
    %v903 = vadd.f32 %v901, %v902
    %v904 = vrot.slane %v903, 2
    %v905 = vadd.f32 %v903, %v904
    %v906 = vrot.slane %v905, 1
    %v907 = vadd.f32 %v905, %v906
    %v908 = vadd.f32 %v856, %v864
    %v909 = vrot.slane %v908, 4
    %v910 = vadd.f32 %v908, %v909
    %v911 = vrot.slane %v910, 2
    %v912 = vadd.f32 %v910, %v911
    %v913 = vrot.slane %v912, 1
    %v914 = vadd.f32 %v912, %v913
    %v915 = vadd.f32 %v857, %v865
    %v916 = vrot.slane %v915, 4
    %v917 = vadd.f32 %v915, %v916
    %v918 = vrot.slane %v917, 2
    %v919 = vadd.f32 %v917, %v918
    %v920 = vrot.slane %v919, 1
    %v921 = vadd.f32 %v919, %v920
    %v930 = vcombine.low %v872, %v879
    %v931 = vcombine.low %v886, %v893
    %v933 = vunpack.c.l.s4 1983009808
    %v934 = vunpack.c.0.s8 %v933
    %v935 = vlaneseq
    %v936 = vshrl.u32 %v935, 7
    %v937 = vsub.s32 %v934, %v936
    %v938 = vrot.slane %v930, %v937
    %v940 = vunpack.c.l.s4 1983009808
    %v941 = vunpack.c.0.s8 %v940
    %v942 = vlaneseq
    %v943 = vshrl.u32 %v942, 7
    %v944 = vsub.s32 %v941, %v943
    %v945 = vrot.slane %v931, %v944
    %v946 = vcombine.low %v938, %v945
    %v947 = vcombine.low %v900, %v907
    %v948 = vcombine.low %v914, %v921
    %v950 = vunpack.c.l.s4 1983009808
    %v951 = vunpack.c.0.s8 %v950
    %v952 = vlaneseq
    %v953 = vshrl.u32 %v952, 7
    %v954 = vsub.s32 %v951, %v953
    %v955 = vrot.slane %v947, %v954
    %v957 = vunpack.c.l.s4 1983009808
    %v958 = vunpack.c.0.s8 %v957
    %v959 = vlaneseq
    %v960 = vshrl.u32 %v959, 7
    %v961 = vsub.s32 %v958, %v960
    %v962 = vrot.slane %v948, %v961
    %v963 = vcombine.low %v955, %v962
    %v966 = vsel %vm90, %v946, 0.0
    %v967 = vsel %vm91, %v963, 0.0
    %v971 = vunpack.c.l.s4 1966171168
    %v972 = vunpack.c.0.s8 %v971
    %v973 = vlaneseq
    %v974 = vshrl.u32 %v973, 7
    %v975 = vsub.s32 %v972, %v974
    %v976 = vrot.slane %v966, %v975
    %v978 = vunpack.c.l.s4 1966171168
    %v979 = vunpack.c.0.s8 %v978
    %v980 = vlaneseq
    %v981 = vshrl.u32 %v980, 7
    %v982 = vsub.s32 %v979, %v981
    %v983 = vrot.slane %v967, %v982
    %v984 = vcombine.low %v976, %v983
    %v986 = vsub.f32 %v55, %v984
    %v987 = vand.u32 2147483647, %v986
    %vm988 = vcmp.lt.f32.partialorder %v987, 0.5
    %v989 = vmul.f32 %v986, 0.5
    %v990 = vmul.f32 %v989, %v986
    %v991 = vsub.f32 %v987, 0.25
    %v992 = vmul.f32 %v991, 0.5
    %v993 = vsel %vm988, %v990, %v992
    %v994 = vlaneseq
    %v995 = vand.u32 %v994, 127
    %v996 = vadd.s32 %v995, 128
    %v997 = vadd.s32 %v995, 256
    %v998 = vadd.s32 %v995, 384
    %v999 = vadd.s32 %v995, 512
    %v1000 = vadd.s32 %v995, 640
    %v1001 = vadd.s32 %v995, 768
    %v1002 = vadd.s32 %v995, 896
    %s1003 = smul.u32 0, 1024
    %v1004 = vstv %s1003
    %v1005 = vadd.s32 %v1004, %v995
    %v1006 = vadd.s32 %v1004, %v996
    %v1007 = vadd.s32 %v1004, %v997
    %v1008 = vadd.s32 %v1004, %v998
    %v1009 = vadd.s32 %v1004, %v999
    %v1010 = vadd.s32 %v1004, %v1000
    %v1011 = vadd.s32 %v1004, %v1001
    %v1012 = vadd.s32 %v1004, %v1002
    %vm1013 = vcmp.lt.s32.totalorder %v1005, 64
    %vm1014 = vcmp.lt.s32.totalorder %v1006, 64
    %vm1015 = vcmp.lt.s32.totalorder %v1007, 64
    %vm1016 = vcmp.lt.s32.totalorder %v1008, 64
    %vm1017 = vcmp.lt.s32.totalorder %v1009, 64
    %vm1018 = vcmp.lt.s32.totalorder %v1010, 64
    %vm1019 = vcmp.lt.s32.totalorder %v1011, 64
    %vm1020 = vcmp.lt.s32.totalorder %v1012, 64
    %v1021 = vrcp.pop %v55
    %v1022 = vmul.f32 %v993, %v1021
    %v1024 = vlaneseq
    %v1025 = vshrl.u32 %v1024, 7
    %v1026 = vsub.s32 0, %v1025
    %v1027 = vrot.slane %v1022, %v1026
    %v1028 = vlaneseq
    %v1029 = vshrl.u32 %v1028, 7
    %v1030 = vsub.s32 1, %v1029
    %v1031 = vrot.slane %v1022, %v1030
    %v1032 = vlaneseq
    %v1033 = vshrl.u32 %v1032, 7
    %v1034 = vsub.s32 2, %v1033
    %v1035 = vrot.slane %v1022, %v1034
    %v1036 = vlaneseq
    %v1037 = vshrl.u32 %v1036, 7
    %v1038 = vsub.s32 3, %v1037
    %v1039 = vrot.slane %v1022, %v1038
    %v1040 = vlaneseq
    %v1041 = vshrl.u32 %v1040, 7
    %v1042 = vsub.s32 4, %v1041
    %v1043 = vrot.slane %v1022, %v1042
    %v1044 = vlaneseq
    %v1045 = vshrl.u32 %v1044, 7
    %v1046 = vsub.s32 5, %v1045
    %v1047 = vrot.slane %v1022, %v1046
    %v1048 = vlaneseq
    %v1049 = vshrl.u32 %v1048, 7
    %v1050 = vsub.s32 6, %v1049
    %v1051 = vrot.slane %v1022, %v1050
    %v1052 = vlaneseq
    %v1053 = vshrl.u32 %v1052, 7
    %v1054 = vsub.s32 7, %v1053
    %v1055 = vrot.slane %v1022, %v1054
    %v1064 = vsel %vm1013, %v1027, 0.0
    %v1065 = vsel %vm1014, %v1031, 0.0
    %v1066 = vsel %vm1015, %v1035, 0.0
    %v1067 = vsel %vm1016, %v1039, 0.0
    %v1068 = vsel %vm1017, %v1043, 0.0
    %v1069 = vsel %vm1018, %v1047, 0.0
    %v1070 = vsel %vm1019, %v1051, 0.0
    %v1071 = vsel %vm1020, %v1055, 0.0
    %v1080 = vcombine.low %v1064, %v1065
    %v1081 = vcombine.low %v1066, %v1067
    %v1082 = vcombine.low %v1068, %v1069
    %v1083 = vcombine.low %v1070, %v1071
    %v1085 = vunpack.c.l.s4 1966171168
    %v1086 = vunpack.c.0.s8 %v1085
    %v1087 = vlaneseq
    %v1088 = vshrl.u32 %v1087, 7
    %v1089 = vsub.s32 %v1086, %v1088
    %v1090 = vrot.slane %v1080, %v1089
    %v1092 = vunpack.c.l.s4 1966171168
    %v1093 = vunpack.c.0.s8 %v1092
    %v1094 = vlaneseq
    %v1095 = vshrl.u32 %v1094, 7
    %v1096 = vsub.s32 %v1093, %v1095
    %v1097 = vrot.slane %v1081, %v1096
    %v1099 = vunpack.c.l.s4 1966171168
    %v1100 = vunpack.c.0.s8 %v1099
    %v1101 = vlaneseq
    %v1102 = vshrl.u32 %v1101, 7
    %v1103 = vsub.s32 %v1100, %v1102
    %v1104 = vrot.slane %v1082, %v1103
    %v1106 = vunpack.c.l.s4 1966171168
    %v1107 = vunpack.c.0.s8 %v1106
    %v1108 = vlaneseq
    %v1109 = vshrl.u32 %v1108, 7
    %v1110 = vsub.s32 %v1107, %v1109
    %v1111 = vrot.slane %v1083, %v1110
    %v1112 = vcombine.low %v1090, %v1097
    %v1113 = vcombine.low %v1104, %v1111
    %v1115 = vunpack.c.l.s4 1966171168
    %v1116 = vunpack.c.0.s8 %v1115
    %v1117 = vlaneseq
    %v1118 = vshrl.u32 %v1117, 7
    %v1119 = vsub.s32 %v1116, %v1118
    %v1120 = vrot.slane %v1112, %v1119
    %v1122 = vunpack.c.l.s4 1966171168
    %v1123 = vunpack.c.0.s8 %v1122
    %v1124 = vlaneseq
    %v1125 = vshrl.u32 %v1124, 7
    %v1126 = vsub.s32 %v1123, %v1125
    %v1127 = vrot.slane %v1113, %v1126
    %v1128 = vcombine.low %v1120, %v1127
    %1130 = vst [vmem:[#allocation8] sm:$0xff] %v1128
    // Predicated region
    $region26: #{tpu_custom_call.1} parent=1 // pred_check
      _
    $region27: #{tpu_custom_call.1} parent=1 // pred_check_branch
      %1132 = sbr.rel (0) target = $region29
    $region28: #{tpu_custom_call.1} parent=1 // pred_region
      %s1134 = ssub.s32 128, 128
      %1135 = vsyncadd [#allocation4], %s1134
      %s1137 = sshll.u32 [#allocation8], 4
      %s1138 = int_to_ptr.vmem [resolvable:$true] %s1137
      %1140 = dma.vmem_to_hbm [thread:$0]  %s1138, 128, %s3, [#allocation4]
    $region29: #{tpu_custom_call.1} parent=1 // pred_fallthru
      _
    // Predicated region
    $region30: #{tpu_custom_call.1} parent=1 // pred_check
      _
    $region31: #{tpu_custom_call.1} parent=1 // pred_check_branch
      %1142 = sbr.rel (0) target = $region33
    $region32: #{tpu_custom_call.1} parent=1 // pred_region
      %1143 = dma.done [#allocation4], 128
    $region33: #{tpu_custom_call.1} parent=1 // pred_fallthru
      _
    %1144 = vsyncpa [#allocation3], 1
    %1145 = vsyncpa [#allocation6], 1
    %1146 = vsyncpa [#allocation4], 1

</llo_original>
